<compile_context>
chip_gen: v7x
topology: tpu7x:2x2x1
jax: 0.10.0
libtpu: 0.0.40
codegen_flags: <defaults>
</compile_context>

<pallas_src>
import jax
import jax.numpy as jnp
from jax import lax
from jax.experimental import pallas as pl
from jax.experimental.pallas import tpu as pltpu


def _basic_block_kernel(x_ref, s1_ref, b1_ref, m1_ref, s2_ref, b2_ref, m2_ref,
                        o_ref, pad1_ref, pad2_ref):
    f32 = jnp.float32
    h = o_ref.shape[1]
    wc_in = x_ref.shape[2]
    wc_out = o_ref.shape[2]

    # ---- bn1 (folded scale/shift) + relu1: lane-dense (H, W*Cin) slab -----
    y1 = jnp.maximum(x_ref[0].astype(f32) * s1_ref[...] + b1_ref[...], 0.0)

    # ---- fill conv1 pad scratch: rows [1, H] = y1, rows 0 / H+1 = zero halo
    # (only the 2 halo rows are zeroed each step; interior is fully rewritten)
    pad1_ref[0:1, :] = jnp.zeros((1, wc_in), pad1_ref.dtype)
    pad1_ref[h + 1:h + 2, :] = jnp.zeros((1, wc_in), pad1_ref.dtype)
    pad1_ref[1:h + 1, :] = y1.astype(pad1_ref.dtype)

    # ---- conv1: 3 banded matmuls (dy = 0,1,2); MXU accumulates over K ------
    acc = jnp.dot(pad1_ref[0:h, :], m1_ref[0], preferred_element_type=f32)
    acc += jnp.dot(pad1_ref[1:h + 1, :], m1_ref[1], preferred_element_type=f32)
    acc += jnp.dot(pad1_ref[2:h + 2, :], m1_ref[2], preferred_element_type=f32)

    # ---- bn2 + relu2, written straight into the conv2 pad scratch ----------
    y2 = jnp.maximum(acc * s2_ref[...] + b2_ref[...], 0.0)
    pad2_ref[0:1, :] = jnp.zeros((1, wc_out), pad2_ref.dtype)
    pad2_ref[h + 1:h + 2, :] = jnp.zeros((1, wc_out), pad2_ref.dtype)
    pad2_ref[1:h + 1, :] = y2.astype(pad2_ref.dtype)

    # ---- conv2: 3 banded matmuls ------------------------------------------
    res = jnp.dot(pad2_ref[0:h, :], m2_ref[0], preferred_element_type=f32)
    res += jnp.dot(pad2_ref[1:h + 1, :], m2_ref[1], preferred_element_type=f32)
    res += jnp.dot(pad2_ref[2:h + 2, :], m2_ref[2], preferred_element_type=f32)

    # ---- identity + residual (re-read x from VMEM; short live range) -------
    o_ref[0] = (x_ref[0].astype(f32) + res).astype(o_ref.dtype)


def _make_banded_weights(w_oihw, width, dtype):
    """(Cout, Cin, 3, 3) OIHW -> (3, W*Cin, W*Cout) banded row-conv matrices.

    M[dy][wi*Cin + ci, wo*Cout + co] = W[dy, wi - wo + 1, ci, co] when the tap
    offset wi - wo + 1 is in [0, 2], else 0.  Row-band structure implements
    the SAME zero-padding along W implicitly; H padding is handled by the
    kernel's halo rows.  Built once, eagerly, in the wrapper (per review).
    """
    c_out, c_in, kh, kw = w_oihw.shape
    assert kh == 3 and kw == 3, "only 3x3 convs supported"
    w_hwio = jnp.transpose(w_oihw, (2, 3, 1, 0)).astype(jnp.float32)
    m = jnp.zeros((kh, width, c_in, width, c_out), jnp.float32)
    for dx in range(kw):
        for wo in range(width):
            wi = wo + dx - 1
            if 0 <= wi < width:
                m = m.at[:, wi, :, wo, :].set(w_hwio[:, dx, :, :])
    return m.reshape(kh, width * c_in, width * c_out).astype(dtype)


@jax.jit
def basic_block_pallas(x_nchw, scale1, shift1, m1, scale2, shift2, m2):
    """x_nchw: (N, C, H, W) f32; m1/m2: banded weights from _make_banded_weights."""
    n, c_in, h, w = x_nchw.shape
    wc_in = w * c_in
    wc_out = m1.shape[-1]
    assert m1.shape[1] == wc_in
    assert wc_out == wc_in  # identity add needs inplanes == planes (stride=1 path)

    # NCHW -> lane-dense (N, H, W*C) slabs (channel minor).
    x2d = jnp.transpose(x_nchw, (0, 2, 3, 1)).reshape(n, h, wc_in)

    # Per-channel BN scale/shift tiled over W so elementwise ops are lane-dense.
    s1 = jnp.tile(scale1.astype(jnp.float32), w).reshape(1, wc_in)
    b1 = jnp.tile(shift1.astype(jnp.float32), w).reshape(1, wc_in)
    s2 = jnp.tile(scale2.astype(jnp.float32), w).reshape(1, wc_out)
    b2 = jnp.tile(shift2.astype(jnp.float32), w).reshape(1, wc_out)

    out = pl.pallas_call(
        _basic_block_kernel,
        out_shape=jax.ShapeDtypeStruct((n, h, wc_out), x_nchw.dtype),
        grid_spec=pltpu.PrefetchScalarGridSpec(
            num_scalar_prefetch=0,
            grid=(n,),
            in_specs=[
                pl.BlockSpec((1, h, wc_in), lambda i: (i, 0, 0)),
                pl.BlockSpec((1, wc_in), lambda i: (0, 0)),
                pl.BlockSpec((1, wc_in), lambda i: (0, 0)),
                pl.BlockSpec((3, wc_in, wc_out), lambda i: (0, 0, 0)),
                pl.BlockSpec((1, wc_out), lambda i: (0, 0)),
                pl.BlockSpec((1, wc_out), lambda i: (0, 0)),
                pl.BlockSpec((3, wc_out, wc_out), lambda i: (0, 0, 0)),
            ],
            out_specs=pl.BlockSpec((1, h, wc_out), lambda i: (i, 0, 0)),
            scratch_shapes=[
                pltpu.VMEM((h + 2, wc_in), m1.dtype),   # conv1 H-padded activations
                pltpu.VMEM((h + 2, wc_out), m2.dtype),  # conv2 H-padded activations
            ],
        ),
        compiler_params=pltpu.CompilerParams(
            dimension_semantics=("parallel",),         # batch axis -> megacore on v7x
            vmem_limit_bytes=32 * 1024 * 1024,
        ),
    )(x2d, s1, b1, m1, s2, b2, m2)

    c_out = wc_out // w
    return jnp.transpose(out.reshape(n, h, w, c_out), (0, 3, 1, 2))


def _reference(x_nchw, scale1, shift1, w1_oihw, scale2, shift2, w2_oihw,
               conv_dtype=jnp.float32):
    """Pure-JAX reference (eval-mode BN folded to scale/shift)."""
    x = jnp.transpose(x_nchw, (0, 2, 3, 1)).astype(jnp.float32)
    dn = ("NHWC", "HWIO", "NHWC")
    w1 = jnp.transpose(w1_oihw, (2, 3, 1, 0)).astype(conv_dtype)
    w2 = jnp.transpose(w2_oihw, (2, 3, 1, 0)).astype(conv_dtype)
    y = jnp.maximum(x * scale1 + shift1, 0.0)
    y = lax.conv_general_dilated(y.astype(conv_dtype), w1, (1, 1), "SAME",
                                 dimension_numbers=dn,
                                 preferred_element_type=jnp.float32)
    y = jnp.maximum(y * scale2 + shift2, 0.0)
    y = lax.conv_general_dilated(y.astype(conv_dtype), w2, (1, 1), "SAME",
                                 dimension_numbers=dn,
                                 preferred_element_type=jnp.float32)
    return jnp.transpose(x + y, (0, 3, 1, 2))


if __name__ == "__main__":
    # Small deterministic setup; inplanes == planes (required for the identity
    # add with stride=1 and downsample=None).  W * C = 128 -> lane-dense.
    N, C, H, W = 2, 8, 16, 16
    inplanes = planes = C
    eps = 1e-5

    key = jax.random.PRNGKey(0)
    keys = jax.random.split(key, 11)

    x = jax.random.normal(keys[0], (N, C, H, W), jnp.float32)

    # bn1 / bn2 params (BatchNorm2d, eval mode with running stats)
    g1 = 1.0 + 0.1 * jax.random.normal(keys[1], (inplanes,), jnp.float32)
    be1 = 0.1 * jax.random.normal(keys[2], (inplanes,), jnp.float32)
    rm1 = 0.1 * jax.random.normal(keys[3], (inplanes,), jnp.float32)
    rv1 = jnp.abs(jax.random.normal(keys[4], (inplanes,), jnp.float32)) + 0.5
    g2 = 1.0 + 0.1 * jax.random.normal(keys[5], (planes,), jnp.float32)
    be2 = 0.1 * jax.random.normal(keys[6], (planes,), jnp.float32)
    rm2 = 0.1 * jax.random.normal(keys[7], (planes,), jnp.float32)
    rv2 = jnp.abs(jax.random.normal(keys[8], (planes,), jnp.float32)) + 0.5

    # conv3x3 weights, PyTorch layout (Cout, Cin, 3, 3), no bias
    w1_oihw = 0.1 * jax.random.normal(keys[9], (planes, inplanes, 3, 3), jnp.float32)
    w2_oihw = 0.1 * jax.random.normal(keys[10], (planes, planes, 3, 3), jnp.float32)

    # Fold eval-mode BN into per-channel scale/shift.
    scale1 = g1 / jnp.sqrt(rv1 + eps)
    shift1 = be1 - rm1 * scale1
    scale2 = g2 / jnp.sqrt(rv2 + eps)
    shift2 = be2 - rm2 * scale2

    # ---- f32 MXU path: tight check against the f32 lax.conv reference -----
    m1_f32 = _make_banded_weights(w1_oihw, W, jnp.float32)
    m2_f32 = _make_banded_weights(w2_oihw, W, jnp.float32)
    out_f32 = jax.block_until_ready(
        basic_block_pallas(x, scale1, shift1, m1_f32, scale2, shift2, m2_f32))
    ref_f32 = jax.block_until_ready(
        _reference(x, scale1, shift1, w1_oihw, scale2, shift2, w2_oihw,
                   conv_dtype=jnp.float32))
    assert out_f32.shape == (N, C, H, W)
    assert jnp.allclose(out_f32, ref_f32, atol=2e-4, rtol=2e-4), (
        float(jnp.max(jnp.abs(out_f32 - ref_f32))))

    # ---- bf16 MXU path (per perf review): bf16 operands, f32 accumulation --
    # Validated against a reference whose conv operands are also cast to bf16
    # (the bf16 quantization itself is the intended precision choice).
    m1_bf16 = _make_banded_weights(w1_oihw, W, jnp.bfloat16)
    m2_bf16 = _make_banded_weights(w2_oihw, W, jnp.bfloat16)
    out_bf16 = jax.block_until_ready(
        basic_block_pallas(x, scale1, shift1, m1_bf16, scale2, shift2, m2_bf16))
    ref_bf16 = jax.block_until_ready(
        _reference(x, scale1, shift1, w1_oihw, scale2, shift2, w2_oihw,
                   conv_dtype=jnp.bfloat16))
    assert jnp.allclose(out_bf16, ref_bf16, atol=1e-2, rtol=1e-2), (
        float(jnp.max(jnp.abs(out_bf16 - ref_bf16))))

    print("KERNEL_OK")
</pallas_src>

<mosaic_0001>
module attributes {stable_mosaic.version = 11 : i64} {
  func.func @_basic_block_kernel(%arg0: i32, %arg1: memref<1x16x128xf32, #tpu.memory_space<vmem>>, %arg2: memref<1x128xf32, #tpu.memory_space<vmem>>, %arg3: memref<1x128xf32, #tpu.memory_space<vmem>>, %arg4: memref<3x128x128xf32, #tpu.memory_space<vmem>>, %arg5: memref<1x128xf32, #tpu.memory_space<vmem>>, %arg6: memref<1x128xf32, #tpu.memory_space<vmem>>, %arg7: memref<3x128x128xf32, #tpu.memory_space<vmem>>, %arg8: memref<1x16x128xf32, #tpu.memory_space<vmem>>, %arg9: memref<18x128xf32, #tpu.memory_space<vmem>>, %arg10: memref<18x128xf32, #tpu.memory_space<vmem>>) attributes {dimension_semantics = [#tpu.dimension_semantics<parallel>], iteration_bounds = array<i64: 2>, scalar_prefetch = 0 : i64, scratch_operands = 2 : i64, tpu.core_type = #tpu.core_type<tc>, window_params = [{transform_indices = @transform_0, window_bounds = array<i64: 1, 16, 128>}, {pipeline_mode = #tpu.pipeline_mode<synchronous>, transform_indices = @transform_1, window_bounds = array<i64: 1, 128>}, {pipeline_mode = #tpu.pipeline_mode<synchronous>, transform_indices = @transform_2, window_bounds = array<i64: 1, 128>}, {pipeline_mode = #tpu.pipeline_mode<synchronous>, transform_indices = @transform_3, window_bounds = array<i64: 3, 128, 128>}, {pipeline_mode = #tpu.pipeline_mode<synchronous>, transform_indices = @transform_4, window_bounds = array<i64: 1, 128>}, {pipeline_mode = #tpu.pipeline_mode<synchronous>, transform_indices = @transform_5, window_bounds = array<i64: 1, 128>}, {pipeline_mode = #tpu.pipeline_mode<synchronous>, transform_indices = @transform_6, window_bounds = array<i64: 3, 128, 128>}, {transform_indices = @transform_7, window_bounds = array<i64: 1, 16, 128>}]} {
    %c0 = arith.constant 0 : index
    %c0_0 = arith.constant 0 : index
    %c0_1 = arith.constant 0 : index
    %0 = vector.load %arg1[%c0, %c0_0, %c0_1] : memref<1x16x128xf32, #tpu.memory_space<vmem>>, vector<1x16x128xf32>
    %1 = vector.shape_cast %0 : vector<1x16x128xf32> to vector<16x128xf32>
    %c0_2 = arith.constant 0 : index
    %c0_3 = arith.constant 0 : index
    %2 = vector.load %arg2[%c0_2, %c0_3] : memref<1x128xf32, #tpu.memory_space<vmem>>, vector<1x128xf32>
    %3 = vector.broadcast %2 : vector<1x128xf32> to vector<16x128xf32>
    %4 = arith.mulf %1, %3 : vector<16x128xf32>
    %c0_4 = arith.constant 0 : index
    %c0_5 = arith.constant 0 : index
    %5 = vector.load %arg3[%c0_4, %c0_5] : memref<1x128xf32, #tpu.memory_space<vmem>>, vector<1x128xf32>
    %6 = vector.broadcast %5 : vector<1x128xf32> to vector<16x128xf32>
    %7 = arith.addf %4, %6 : vector<16x128xf32>
    %cst = arith.constant 0.000000e+00 : f32
    %8 = vector.broadcast %cst : f32 to vector<16x128xf32>
    %9 = arith.maximumf %7, %8 : vector<16x128xf32>
    %cst_6 = arith.constant 0.000000e+00 : f32
    %10 = vector.broadcast %cst_6 : f32 to vector<1x128xf32>
    %c0_7 = arith.constant 0 : index
    %c0_8 = arith.constant 0 : index
    %11 = vector.load %arg9[%c0_7, %c0_8] : memref<18x128xf32, #tpu.memory_space<vmem>>, vector<1x128xf32>
    tpu.vector_store %arg9[%c0_7, %c0_8], %10 {strides = array<i32>} : memref<18x128xf32, #tpu.memory_space<vmem>>, vector<1x128xf32>,
    %cst_9 = arith.constant 0.000000e+00 : f32
    %12 = vector.broadcast %cst_9 : f32 to vector<1x128xf32>
    %c17 = arith.constant 17 : index
    %c0_10 = arith.constant 0 : index
    %13 = vector.load %arg9[%c17, %c0_10] : memref<18x128xf32, #tpu.memory_space<vmem>>, vector<1x128xf32>
    tpu.vector_store %arg9[%c17, %c0_10], %12 {strides = array<i32>} : memref<18x128xf32, #tpu.memory_space<vmem>>, vector<1x128xf32>,
    %c1 = arith.constant 1 : index
    %c0_11 = arith.constant 0 : index
    %14 = vector.load %arg9[%c1, %c0_11] : memref<18x128xf32, #tpu.memory_space<vmem>>, vector<16x128xf32>
    tpu.vector_store %arg9[%c1, %c0_11], %9 {strides = array<i32>} : memref<18x128xf32, #tpu.memory_space<vmem>>, vector<16x128xf32>,
    %c0_12 = arith.constant 0 : index
    %c0_13 = arith.constant 0 : index
    %15 = vector.load %arg9[%c0_12, %c0_13] : memref<18x128xf32, #tpu.memory_space<vmem>>, vector<16x128xf32>
    %c0_14 = arith.constant 0 : index
    %c0_15 = arith.constant 0 : index
    %c0_16 = arith.constant 0 : index
    %16 = vector.load %arg4[%c0_14, %c0_15, %c0_16] : memref<3x128x128xf32, #tpu.memory_space<vmem>>, vector<1x128x128xf32>
    %17 = vector.shape_cast %16 : vector<1x128x128xf32> to vector<128x128xf32>
    %cst_17 = arith.constant dense<0.000000e+00> : vector<16x128xf32>
    %18 = tpu.matmul %15, %17, %cst_17 {dimension_numbers = #tpu.dot_dimension_numbers<[1], [0], [0], [1], [0, 0, 1, 1], [], []>} : vector<16x128xf32>, vector<128x128xf32>, vector<16x128xf32> -> vector<16x128xf32>
    %c1_18 = arith.constant 1 : index
    %c0_19 = arith.constant 0 : index
    %19 = vector.load %arg9[%c1_18, %c0_19] : memref<18x128xf32, #tpu.memory_space<vmem>>, vector<16x128xf32>
    %c1_20 = arith.constant 1 : index
    %c0_21 = arith.constant 0 : index
    %c0_22 = arith.constant 0 : index
    %20 = vector.load %arg4[%c1_20, %c0_21, %c0_22] : memref<3x128x128xf32, #tpu.memory_space<vmem>>, vector<1x128x128xf32>
    %21 = vector.shape_cast %20 : vector<1x128x128xf32> to vector<128x128xf32>
    %cst_23 = arith.constant dense<0.000000e+00> : vector<16x128xf32>
    %22 = tpu.matmul %19, %21, %cst_23 {dimension_numbers = #tpu.dot_dimension_numbers<[1], [0], [0], [1], [0, 0, 1, 1], [], []>} : vector<16x128xf32>, vector<128x128xf32>, vector<16x128xf32> -> vector<16x128xf32>
    %23 = arith.addf %18, %22 : vector<16x128xf32>
    %c2 = arith.constant 2 : index
    %c0_24 = arith.constant 0 : index
    %24 = vector.load %arg9[%c2, %c0_24] : memref<18x128xf32, #tpu.memory_space<vmem>>, vector<16x128xf32>
    %c2_25 = arith.constant 2 : index
    %c0_26 = arith.constant 0 : index
    %c0_27 = arith.constant 0 : index
    %25 = vector.load %arg4[%c2_25, %c0_26, %c0_27] : memref<3x128x128xf32, #tpu.memory_space<vmem>>, vector<1x128x128xf32>
    %26 = vector.shape_cast %25 : vector<1x128x128xf32> to vector<128x128xf32>
    %cst_28 = arith.constant dense<0.000000e+00> : vector<16x128xf32>
    %27 = tpu.matmul %24, %26, %cst_28 {dimension_numbers = #tpu.dot_dimension_numbers<[1], [0], [0], [1], [0, 0, 1, 1], [], []>} : vector<16x128xf32>, vector<128x128xf32>, vector<16x128xf32> -> vector<16x128xf32>
    %28 = arith.addf %23, %27 : vector<16x128xf32>
    %c0_29 = arith.constant 0 : index
    %c0_30 = arith.constant 0 : index
    %29 = vector.load %arg5[%c0_29, %c0_30] : memref<1x128xf32, #tpu.memory_space<vmem>>, vector<1x128xf32>
    %30 = vector.broadcast %29 : vector<1x128xf32> to vector<16x128xf32>
    %31 = arith.mulf %28, %30 : vector<16x128xf32>
    %c0_31 = arith.constant 0 : index
    %c0_32 = arith.constant 0 : index
    %32 = vector.load %arg6[%c0_31, %c0_32] : memref<1x128xf32, #tpu.memory_space<vmem>>, vector<1x128xf32>
    %33 = vector.broadcast %32 : vector<1x128xf32> to vector<16x128xf32>
    %34 = arith.addf %31, %33 : vector<16x128xf32>
    %cst_33 = arith.constant 0.000000e+00 : f32
    %35 = vector.broadcast %cst_33 : f32 to vector<16x128xf32>
    %36 = arith.maximumf %34, %35 : vector<16x128xf32>
    %cst_34 = arith.constant 0.000000e+00 : f32
    %37 = vector.broadcast %cst_34 : f32 to vector<1x128xf32>
    %c0_35 = arith.constant 0 : index
    %c0_36 = arith.constant 0 : index
    %38 = vector.load %arg10[%c0_35, %c0_36] : memref<18x128xf32, #tpu.memory_space<vmem>>, vector<1x128xf32>
    tpu.vector_store %arg10[%c0_35, %c0_36], %37 {strides = array<i32>} : memref<18x128xf32, #tpu.memory_space<vmem>>, vector<1x128xf32>,
    %cst_37 = arith.constant 0.000000e+00 : f32
    %39 = vector.broadcast %cst_37 : f32 to vector<1x128xf32>
    %c17_38 = arith.constant 17 : index
    %c0_39 = arith.constant 0 : index
    %40 = vector.load %arg10[%c17_38, %c0_39] : memref<18x128xf32, #tpu.memory_space<vmem>>, vector<1x128xf32>
    tpu.vector_store %arg10[%c17_38, %c0_39], %39 {strides = array<i32>} : memref<18x128xf32, #tpu.memory_space<vmem>>, vector<1x128xf32>,
    %c1_40 = arith.constant 1 : index
    %c0_41 = arith.constant 0 : index
    %41 = vector.load %arg10[%c1_40, %c0_41] : memref<18x128xf32, #tpu.memory_space<vmem>>, vector<16x128xf32>
    tpu.vector_store %arg10[%c1_40, %c0_41], %36 {strides = array<i32>} : memref<18x128xf32, #tpu.memory_space<vmem>>, vector<16x128xf32>,
    %c0_42 = arith.constant 0 : index
    %c0_43 = arith.constant 0 : index
    %42 = vector.load %arg10[%c0_42, %c0_43] : memref<18x128xf32, #tpu.memory_space<vmem>>, vector<16x128xf32>
    %c0_44 = arith.constant 0 : index
    %c0_45 = arith.constant 0 : index
    %c0_46 = arith.constant 0 : index
    %43 = vector.load %arg7[%c0_44, %c0_45, %c0_46] : memref<3x128x128xf32, #tpu.memory_space<vmem>>, vector<1x128x128xf32>
    %44 = vector.shape_cast %43 : vector<1x128x128xf32> to vector<128x128xf32>
    %cst_47 = arith.constant dense<0.000000e+00> : vector<16x128xf32>
    %45 = tpu.matmul %42, %44, %cst_47 {dimension_numbers = #tpu.dot_dimension_numbers<[1], [0], [0], [1], [0, 0, 1, 1], [], []>} : vector<16x128xf32>, vector<128x128xf32>, vector<16x128xf32> -> vector<16x128xf32>
    %c1_48 = arith.constant 1 : index
    %c0_49 = arith.constant 0 : index
    %46 = vector.load %arg10[%c1_48, %c0_49] : memref<18x128xf32, #tpu.memory_space<vmem>>, vector<16x128xf32>
    %c1_50 = arith.constant 1 : index
    %c0_51 = arith.constant 0 : index
    %c0_52 = arith.constant 0 : index
    %47 = vector.load %arg7[%c1_50, %c0_51, %c0_52] : memref<3x128x128xf32, #tpu.memory_space<vmem>>, vector<1x128x128xf32>
    %48 = vector.shape_cast %47 : vector<1x128x128xf32> to vector<128x128xf32>
    %cst_53 = arith.constant dense<0.000000e+00> : vector<16x128xf32>
    %49 = tpu.matmul %46, %48, %cst_53 {dimension_numbers = #tpu.dot_dimension_numbers<[1], [0], [0], [1], [0, 0, 1, 1], [], []>} : vector<16x128xf32>, vector<128x128xf32>, vector<16x128xf32> -> vector<16x128xf32>
    %50 = arith.addf %45, %49 : vector<16x128xf32>
    %c2_54 = arith.constant 2 : index
    %c0_55 = arith.constant 0 : index
    %51 = vector.load %arg10[%c2_54, %c0_55] : memref<18x128xf32, #tpu.memory_space<vmem>>, vector<16x128xf32>
    %c2_56 = arith.constant 2 : index
    %c0_57 = arith.constant 0 : index
    %c0_58 = arith.constant 0 : index
    %52 = vector.load %arg7[%c2_56, %c0_57, %c0_58] : memref<3x128x128xf32, #tpu.memory_space<vmem>>, vector<1x128x128xf32>
    %53 = vector.shape_cast %52 : vector<1x128x128xf32> to vector<128x128xf32>
    %cst_59 = arith.constant dense<0.000000e+00> : vector<16x128xf32>
    %54 = tpu.matmul %51, %53, %cst_59 {dimension_numbers = #tpu.dot_dimension_numbers<[1], [0], [0], [1], [0, 0, 1, 1], [], []>} : vector<16x128xf32>, vector<128x128xf32>, vector<16x128xf32> -> vector<16x128xf32>
    %55 = arith.addf %50, %54 : vector<16x128xf32>
    %c0_60 = arith.constant 0 : index
    %c0_61 = arith.constant 0 : index
    %c0_62 = arith.constant 0 : index
    %56 = vector.load %arg1[%c0_60, %c0_61, %c0_62] : memref<1x16x128xf32, #tpu.memory_space<vmem>>, vector<1x16x128xf32>
    %57 = vector.shape_cast %56 : vector<1x16x128xf32> to vector<16x128xf32>
    %58 = arith.addf %57, %55 : vector<16x128xf32>
    %c0_63 = arith.constant 0 : index
    %c0_64 = arith.constant 0 : index
    %c0_65 = arith.constant 0 : index
    %59 = vector.load %arg8[%c0_63, %c0_64, %c0_65] : memref<1x16x128xf32, #tpu.memory_space<vmem>>, vector<1x16x128xf32>
    %60 = vector.shape_cast %59 : vector<1x16x128xf32> to vector<16x128xf32>
    %61 = vector.shape_cast %58 : vector<16x128xf32> to vector<1x16x128xf32>
    tpu.vector_store %arg8[%c0_63, %c0_64, %c0_65], %61 {strides = array<i32>} : memref<1x16x128xf32, #tpu.memory_space<vmem>>, vector<1x16x128xf32>,
    return
  }
  func.func @transform_0(%arg0: i32) -> (i32, i32, i32) {
    %c0_i32 = arith.constant 0 : i32
    %c0_i32_0 = arith.constant 0 : i32
    %c0_i32_1 = arith.constant 0 : i32
    return %arg0, %c0_i32, %c0_i32_0 : i32, i32, i32
  }
  func.func @transform_1(%arg0: i32) -> (i32, i32) {
    %c0_i32 = arith.constant 0 : i32
    %c0_i32_0 = arith.constant 0 : i32
    %c0_i32_1 = arith.constant 0 : i32
    return %c0_i32, %c0_i32_0 : i32, i32
  }
  func.func @transform_2(%arg0: i32) -> (i32, i32) {
    %c0_i32 = arith.constant 0 : i32
    %c0_i32_0 = arith.constant 0 : i32
    %c0_i32_1 = arith.constant 0 : i32
    return %c0_i32, %c0_i32_0 : i32, i32
  }
  func.func @transform_3(%arg0: i32) -> (i32, i32, i32) {
    %c0_i32 = arith.constant 0 : i32
    %c0_i32_0 = arith.constant 0 : i32
    %c0_i32_1 = arith.constant 0 : i32
    %c0_i32_2 = arith.constant 0 : i32
    return %c0_i32, %c0_i32_0, %c0_i32_1 : i32, i32, i32
  }
  func.func @transform_4(%arg0: i32) -> (i32, i32) {
    %c0_i32 = arith.constant 0 : i32
    %c0_i32_0 = arith.constant 0 : i32
    %c0_i32_1 = arith.constant 0 : i32
    return %c0_i32, %c0_i32_0 : i32, i32
  }
  func.func @transform_5(%arg0: i32) -> (i32, i32) {
    %c0_i32 = arith.constant 0 : i32
    %c0_i32_0 = arith.constant 0 : i32
    %c0_i32_1 = arith.constant 0 : i32
    return %c0_i32, %c0_i32_0 : i32, i32
  }
  func.func @transform_6(%arg0: i32) -> (i32, i32, i32) {
    %c0_i32 = arith.constant 0 : i32
    %c0_i32_0 = arith.constant 0 : i32
    %c0_i32_1 = arith.constant 0 : i32
    %c0_i32_2 = arith.constant 0 : i32
    return %c0_i32, %c0_i32_0, %c0_i32_1 : i32, i32, i32
  }
  func.func @transform_7(%arg0: i32) -> (i32, i32, i32) {
    %c0_i32 = arith.constant 0 : i32
    %c0_i32_0 = arith.constant 0 : i32
    %c0_i32_1 = arith.constant 0 : i32
    return %arg0, %c0_i32, %c0_i32_0 : i32, i32, i32
  }
}

</mosaic_0001>

<llo_original>
// kernel: tile.23
$region0: #{tile.23}
  #allocation0 [shape = 's32[1]{0}', space=sflag, size = 0x4, scoped, tag = 'scoped memory for tile.23']
  %s0 = inlined_call_operand.vmem [shape: f32[8], index: 0, kind: input, shape index: {}]
  %s1 = inlined_call_operand.vmem [shape: f32[16,8], index: 1, kind: output, shape index: {}]
  // Predicated region
  $region2: #{tile.23} parent=0 // pred_check
    _
  $region3: #{tile.23} parent=0 // pred_check_branch
    %3 = sbr.rel (0) target = $region5
  $region4: #{tile.23} parent=0 // pred_region
    _
  $region5: #{tile.23} parent=0 // pred_fallthru
    _
  %v4 = vld [vmem:[%s0] ss:$0 sm:$0xff]
  %5 = vst [vmem:[%s1] sm:$0xff] %v4
  %s6 = scalar_lea.vmem %s1, 8
  %7 = vst [vmem:[%s6] sm:$0xff] %v4

// kernel: tile.24
$region0: #{tile.24}
  %s0 = inlined_call_operand.vmem [shape: f32[16,8], index: 0, kind: input, shape index: {}]
  %s1 = inlined_call_operand.vmem [shape: f32[1,128], index: 1, kind: output, shape index: {}]
  $region1: #{tile.24} parent=0
    #allocation0 [shape = 'u8[4096]{0}', space=vmem, size = 0x1000, scoped, tag = 'scoped mem for output reshape']
    %v2 = vld [vmem:[%s0] sm:$0x1]
    %vm3 = vcmask 64512
    %4 = vst.msk [vmem:[#allocation0] sm:$0x1] %vm3, %v2
    %s5 = scalar_lea.vmem %s0, 15
    %v6 = vld [vmem:[%s5] sm:$0x1]
    %7 = vrot.lane.b32.xlu0 %v6, 120
    %v8 = vpop.permute.xlu0 %7
    %vm9 = vcmask 1048512
    %10 = vst.msk [vmem:[#allocation0] sm:$0x1] %vm9, %v8
    %s11 = scalar_lea.vmem %s0, 14
    %v12 = vld [vmem:[%s11] sm:$0x1]
    %13 = vrot.lane.b32.xlu0 %v12, 112
    %v14 = vpop.permute.xlu0 %13
    %vm15 = vcmask 982912
    %16 = vst.msk [vmem:[#allocation0] sm:$0x1] %vm15, %v14
    %s17 = scalar_lea.vmem %s0, 13
    %v18 = vld [vmem:[%s17] sm:$0x1]
    %19 = vrot.lane.b32.xlu0 %v18, 104
    %v20 = vpop.permute.xlu0 %19
    %vm21 = vcmask 917312
    %22 = vst.msk [vmem:[#allocation0] sm:$0x1] %vm21, %v20
    %s23 = scalar_lea.vmem %s0, 12
    %v24 = vld [vmem:[%s23] sm:$0x1]
    %25 = vrot.lane.b32.xlu0 %v24, 96
    %v26 = vpop.permute.xlu0 %25
    %vm27 = vcmask 851712
    %28 = vst.msk [vmem:[#allocation0] sm:$0x1] %vm27, %v26
    %s29 = scalar_lea.vmem %s0, 11
    %v30 = vld [vmem:[%s29] sm:$0x1]
    %31 = vrot.lane.b32.xlu0 %v30, 88
    %v32 = vpop.permute.xlu0 %31
    %vm33 = vcmask 786112
    %34 = vst.msk [vmem:[#allocation0] sm:$0x1] %vm33, %v32
    %s35 = scalar_lea.vmem %s0, 10
    %v36 = vld [vmem:[%s35] sm:$0x1]
    %37 = vrot.lane.b32.xlu0 %v36, 80
    %v38 = vpop.permute.xlu0 %37
    %vm39 = vcmask 720512
    %40 = vst.msk [vmem:[#allocation0] sm:$0x1] %vm39, %v38
    %s41 = scalar_lea.vmem %s0, 9
    %v42 = vld [vmem:[%s41] sm:$0x1]
    %43 = vrot.lane.b32.xlu0 %v42, 72
    %v44 = vpop.permute.xlu0 %43
    %vm45 = vcmask 654912
    %46 = vst.msk [vmem:[#allocation0] sm:$0x1] %vm45, %v44
    %s47 = scalar_lea.vmem %s0, 8
    %v48 = vld [vmem:[%s47] sm:$0x1]
    %49 = vrot.lane.b32.xlu0 %v48, 64
    %v50 = vpop.permute.xlu0 %49
    %vm51 = vcmask 589312
    %52 = vst.msk [vmem:[#allocation0] sm:$0x1] %vm51, %v50
    %s53 = scalar_lea.vmem %s0, 7
    %v54 = vld [vmem:[%s53] sm:$0x1]
    %55 = vrot.lane.b32.xlu0 %v54, 56
    %v56 = vpop.permute.xlu0 %55
    %vm57 = vcmask 523712
    %58 = vst.msk [vmem:[#allocation0] sm:$0x1] %vm57, %v56
    %s59 = scalar_lea.vmem %s0, 6
    %v60 = vld [vmem:[%s59] sm:$0x1]
    %61 = vrot.lane.b32.xlu0 %v60, 48
    %v62 = vpop.permute.xlu0 %61
    %vm63 = vcmask 458112
    %64 = vst.msk [vmem:[#allocation0] sm:$0x1] %vm63, %v62
    %s65 = scalar_lea.vmem %s0, 5
    %v66 = vld [vmem:[%s65] sm:$0x1]
    %67 = vrot.lane.b32.xlu0 %v66, 40
    %v68 = vpop.permute.xlu0 %67
    %vm69 = vcmask 392512
    %70 = vst.msk [vmem:[#allocation0] sm:$0x1] %vm69, %v68
    %s71 = scalar_lea.vmem %s0, 4
    %v72 = vld [vmem:[%s71] sm:$0x1]
    %73 = vrot.lane.b32.xlu0 %v72, 32
    %v74 = vpop.permute.xlu0 %73
    %vm75 = vcmask 326912
    %76 = vst.msk [vmem:[#allocation0] sm:$0x1] %vm75, %v74
    %s77 = scalar_lea.vmem %s0, 3
    %v78 = vld [vmem:[%s77] sm:$0x1]
    %79 = vrot.lane.b32.xlu0 %v78, 24
    %v80 = vpop.permute.xlu0 %79
    %vm81 = vcmask 261312
    %82 = vst.msk [vmem:[#allocation0] sm:$0x1] %vm81, %v80
    %s83 = scalar_lea.vmem %s0, 2
    %v84 = vld [vmem:[%s83] sm:$0x1]
    %85 = vrot.lane.b32.xlu0 %v84, 16
    %v86 = vpop.permute.xlu0 %85
    %vm87 = vcmask 195712
    %88 = vst.msk [vmem:[#allocation0] sm:$0x1] %vm87, %v86
    %s89 = scalar_lea.vmem %s0, 1
    %v90 = vld [vmem:[%s89] sm:$0x1]
    %91 = vrot.lane.b32.xlu0 %v90, 8
    %v92 = vpop.permute.xlu0 %91
    %vm93 = vcmask 130112
    %94 = vst.msk [vmem:[#allocation0] sm:$0x1] %vm93, %v92
    %s96 = sshllo.u32 0, 1
    %v98 = vld [vmem:[#allocation0] sm:%s96]
    %s99 = sshllo.u32 0, 1
    %100 = vst [vmem:[%s1] sm:%s99] %v98

// kernel: basic_block_pallas.1
$region0: #{basic_block_pallas.1}
  #allocation0 [shape = 'u32[]', space=smem, size = 0x4, offset = 0x4, fixed_abs, tag = 'smem constant byte address 0x4 - core index']
  #allocation1 [shape = 'u32[144,128]{1,0:T(1,128)}', space=vmem, size = 0x12000, scoped, tag = 'internal scratch']
  #allocation2 [shape = 'f32[18,128]{1,0:T(8,128)}', space=vmem, size = 0x3000, scoped, tag = 'scratch operand']
  #allocation3 [shape = 'f32[18,128]{1,0:T(8,128)}', space=vmem, size = 0x3000, scoped, tag = 'scratch operand']
  %s0 = inlined_call_operand.vmem [shape: f32[2,16,128], index: 0, kind: input, shape index: {}]
  %s1 = inlined_call_operand.vmem [shape: f32[1,128], index: 1, kind: input, shape index: {}]
  %s2 = inlined_call_operand.vmem [shape: f32[1,128], index: 2, kind: input, shape index: {}]
  %s3 = inlined_call_operand.vmem [shape: f32[3,128,128], index: 3, kind: input, shape index: {}]
  %s4 = inlined_call_operand.vmem [shape: f32[1,128], index: 4, kind: input, shape index: {}]
  %s5 = inlined_call_operand.vmem [shape: f32[1,128], index: 5, kind: input, shape index: {}]
  %s6 = inlined_call_operand.vmem [shape: f32[3,128,128], index: 6, kind: input, shape index: {}]
  %s7 = inlined_call_operand.vmem [shape: f32[2,16,128], index: 7, kind: output, shape index: {}]
  %s8 = sld [smem:[#allocation0]]
  $region61: #{basic_block_pallas.1} parent=0
    _
  %s10 = ssub.s32 1, %s8
  %s11 = scalar_select 0, %s10, %s8
  loop: start=0, step=1, limit=4
  $region2: #{basic_block_pallas.1} parent=0 // loop_pre_header
    _
  $region3: #{basic_block_pallas.1} parent=0 // loop_header
    %s13 = sphi 0, %s17
    %p14 = scmp.ge.s32.totalorder %s13, 4
    %s23 = sphi 0, %s25
    %s26 = sphi 0, %s23
    %s27 = sphi 0, %s26
    %s43 = sphi 0, %s27
    %s47 = sphi 0, %s47
    %s49 = sphi 0, %s47
    %s50 = sphi 0, %s49
    %s64 = sphi 0, %s50
    %s68 = sphi 0, %s68
    %s70 = sphi 0, %s68
    %s71 = sphi 0, %s70
    %s85 = sphi 0, %s71
    %s89 = sphi 0, %s89
    %s91 = sphi 0, %s89
    %s92 = sphi 0, %s91
    %s106 = sphi 0, %s92
    %s110 = sphi 0, %s110
    %s112 = sphi 0, %s110
    %s113 = sphi 0, %s112
    %s127 = sphi 0, %s113
    %s131 = sphi 0, %s131
    %s133 = sphi 0, %s131
    %s134 = sphi 0, %s133
    %s148 = sphi 0, %s134
    %s152 = sphi 0, %s152
    %s154 = sphi 0, %s152
    %s155 = sphi 0, %s154
    %s169 = sphi 0, %s155
    %s175 = sphi 0, %s177
    %s178 = sphi 0, %s175
    %s179 = sphi 0, %s178
    %s195 = sphi 0, %s179
  $region4: #{basic_block_pallas.1} parent=0 // loop_header_branch
    %16 = sbr.rel (%p14) target = $region8
  $region5: #{basic_block_pallas.1} parent=0 // loop_body
    %s18 = ssub.s32 %s13, 1
    %s19 = ssub.s32 %s13, 2
    %s20 = sadd.s32 %s13, 1
    %s21 = ssub.s32 %s13, %s20
    %p22 = scmp.eq.s32.totalorder %s21, 0
    %s24 = sadd.s32 %s23, 1
    %s25 = scalar_select %p22, %s23, %s24
    %p28 = pneg %p22
    %p29 = scmp.eq.s32.totalorder %s13, 1
    %p30 = por %p28, %p29
    %p31 = scmp.ne.s32.totalorder %s23, %s26
    %p32 = scmp.eq.s32.totalorder %s13, 0
    %p33 = por %p31, %p32
    %p34 = scmp.ne.s32.totalorder %s23, %s26
    %p35 = scmp.eq.s32.totalorder %s18, 1
    %p36 = por %p34, %p35
    %p37 = scmp.ne.s32.totalorder %s26, %s27
    %p38 = scmp.eq.s32.totalorder %s18, 0
    %p39 = por %p37, %p38
    %p40 = scmp.ne.s32.totalorder %s26, %s27
    %p41 = scmp.eq.s32.totalorder %s19, 1
    %p42 = por %p40, %p41
    %p44 = scmp.ne.s32.totalorder %s27, %s43
    %p45 = scmp.eq.s32.totalorder %s19, 0
    %p46 = por %p44, %p45
    %s48 = sadd.s32 %s47, 1
    %p51 = scmp.eq.s32.totalorder %s13, 1
    %p52 = scmp.ne.s32.totalorder %s47, %s49
    %p53 = scmp.eq.s32.totalorder %s13, 0
    %p54 = por %p52, %p53
    %p55 = scmp.ne.s32.totalorder %s47, %s49
    %p56 = scmp.eq.s32.totalorder %s18, 1
    %p57 = por %p55, %p56
    %p58 = scmp.ne.s32.totalorder %s49, %s50
    %p59 = scmp.eq.s32.totalorder %s18, 0
    %p60 = por %p58, %p59
    %p61 = scmp.ne.s32.totalorder %s49, %s50
    %p62 = scmp.eq.s32.totalorder %s19, 1
    %p63 = por %p61, %p62
    %p65 = scmp.ne.s32.totalorder %s50, %s64
    %p66 = scmp.eq.s32.totalorder %s19, 0
    %p67 = por %p65, %p66
    %s69 = sadd.s32 %s68, 1
    %p72 = scmp.eq.s32.totalorder %s13, 1
    %p73 = scmp.ne.s32.totalorder %s68, %s70
    %p74 = scmp.eq.s32.totalorder %s13, 0
    %p75 = por %p73, %p74
    %p76 = scmp.ne.s32.totalorder %s68, %s70
    %p77 = scmp.eq.s32.totalorder %s18, 1
    %p78 = por %p76, %p77
    %p79 = scmp.ne.s32.totalorder %s70, %s71
    %p80 = scmp.eq.s32.totalorder %s18, 0
    %p81 = por %p79, %p80
    %p82 = scmp.ne.s32.totalorder %s70, %s71
    %p83 = scmp.eq.s32.totalorder %s19, 1
    %p84 = por %p82, %p83
    %p86 = scmp.ne.s32.totalorder %s71, %s85
    %p87 = scmp.eq.s32.totalorder %s19, 0
    %p88 = por %p86, %p87
    %s90 = sadd.s32 %s89, 1
    %p93 = scmp.eq.s32.totalorder %s13, 1
    %p94 = scmp.ne.s32.totalorder %s89, %s91
    %p95 = scmp.eq.s32.totalorder %s13, 0
    %p96 = por %p94, %p95
    %p97 = scmp.ne.s32.totalorder %s89, %s91
    %p98 = scmp.eq.s32.totalorder %s18, 1
    %p99 = por %p97, %p98
    %p100 = scmp.ne.s32.totalorder %s91, %s92
    %p101 = scmp.eq.s32.totalorder %s18, 0
    %p102 = por %p100, %p101
    %p103 = scmp.ne.s32.totalorder %s91, %s92
    %p104 = scmp.eq.s32.totalorder %s19, 1
    %p105 = por %p103, %p104
    %p107 = scmp.ne.s32.totalorder %s92, %s106
    %p108 = scmp.eq.s32.totalorder %s19, 0
    %p109 = por %p107, %p108
    %s111 = sadd.s32 %s110, 1
    %p114 = scmp.eq.s32.totalorder %s13, 1
    %p115 = scmp.ne.s32.totalorder %s110, %s112
    %p116 = scmp.eq.s32.totalorder %s13, 0
    %p117 = por %p115, %p116
    %p118 = scmp.ne.s32.totalorder %s110, %s112
    %p119 = scmp.eq.s32.totalorder %s18, 1
    %p120 = por %p118, %p119
    %p121 = scmp.ne.s32.totalorder %s112, %s113
    %p122 = scmp.eq.s32.totalorder %s18, 0
    %p123 = por %p121, %p122
    %p124 = scmp.ne.s32.totalorder %s112, %s113
    %p125 = scmp.eq.s32.totalorder %s19, 1
    %p126 = por %p124, %p125
    %p128 = scmp.ne.s32.totalorder %s113, %s127
    %p129 = scmp.eq.s32.totalorder %s19, 0
    %p130 = por %p128, %p129
    %s132 = sadd.s32 %s131, 1
    %p135 = scmp.eq.s32.totalorder %s13, 1
    %p136 = scmp.ne.s32.totalorder %s131, %s133
    %p137 = scmp.eq.s32.totalorder %s13, 0
    %p138 = por %p136, %p137
    %p139 = scmp.ne.s32.totalorder %s131, %s133
    %p140 = scmp.eq.s32.totalorder %s18, 1
    %p141 = por %p139, %p140
    %p142 = scmp.ne.s32.totalorder %s133, %s134
    %p143 = scmp.eq.s32.totalorder %s18, 0
    %p144 = por %p142, %p143
    %p145 = scmp.ne.s32.totalorder %s133, %s134
    %p146 = scmp.eq.s32.totalorder %s19, 1
    %p147 = por %p145, %p146
    %p149 = scmp.ne.s32.totalorder %s134, %s148
    %p150 = scmp.eq.s32.totalorder %s19, 0
    %p151 = por %p149, %p150
    %s153 = sadd.s32 %s152, 1
    %p156 = scmp.eq.s32.totalorder %s13, 1
    %p157 = scmp.ne.s32.totalorder %s152, %s154
    %p158 = scmp.eq.s32.totalorder %s13, 0
    %p159 = por %p157, %p158
    %p160 = scmp.ne.s32.totalorder %s152, %s154
    %p161 = scmp.eq.s32.totalorder %s18, 1
    %p162 = por %p160, %p161
    %p163 = scmp.ne.s32.totalorder %s154, %s155
    %p164 = scmp.eq.s32.totalorder %s18, 0
    %p165 = por %p163, %p164
    %p166 = scmp.ne.s32.totalorder %s154, %s155
    %p167 = scmp.eq.s32.totalorder %s19, 1
    %p168 = por %p166, %p167
    %p170 = scmp.ne.s32.totalorder %s155, %s169
    %p171 = scmp.eq.s32.totalorder %s19, 0
    %p172 = por %p170, %p171
    %s173 = ssub.s32 %s13, %s20
    %p174 = scmp.eq.s32.totalorder %s173, 0
    %s176 = sadd.s32 %s175, 1
    %s177 = scalar_select %p174, %s175, %s176
    %p180 = pneg %p174
    %p181 = scmp.eq.s32.totalorder %s13, 1
    %p182 = por %p180, %p181
    %p183 = scmp.ne.s32.totalorder %s175, %s178
    %p184 = scmp.eq.s32.totalorder %s13, 0
    %p185 = por %p183, %p184
    %p186 = scmp.ne.s32.totalorder %s175, %s178
    %p187 = scmp.eq.s32.totalorder %s18, 1
    %p188 = por %p186, %p187
    %p189 = scmp.ne.s32.totalorder %s178, %s179
    %p190 = scmp.eq.s32.totalorder %s18, 0
    %p191 = por %p189, %p190
    %p192 = scmp.ne.s32.totalorder %s178, %s179
    %p193 = scmp.eq.s32.totalorder %s19, 1
    %p194 = por %p192, %p193
    %p196 = scmp.ne.s32.totalorder %s179, %s195
    %p197 = scmp.eq.s32.totalorder %s19, 0
    %p198 = por %p196, %p197
    %p199 = scmp.le.s32.totalorder 1, %s13
    %p200 = scmp.lt.s32.totalorder %s13, 3
    %p201 = pnand %p199, %p200
    %p202 = pneg %p201
    // Predicated region
    $region9: #{basic_block_pallas.1} parent=5 // pred_check
      _
    $region10: #{basic_block_pallas.1} parent=5 // pred_check_branch
      %204 = sbr.rel (%p201) target = $region12
    $region11: #{basic_block_pallas.1} parent=5 // pred_region
      %s205 = ssub.s32 %s13, 1
      // Predicated region
      $region13: #{basic_block_pallas.1} parent=11 // pred_check
        %p206 = pneg %p60
      $region14: #{basic_block_pallas.1} parent=11 // pred_check_branch
        %208 = sbr.rel (%p206) target = $region16
      $region15: #{basic_block_pallas.1} parent=11 // pred_region
        _
      $region16: #{basic_block_pallas.1} parent=11 // pred_fallthru
        _
      // Predicated region
      $region17: #{basic_block_pallas.1} parent=11 // pred_check
        %p209 = pneg %p81
      $region18: #{basic_block_pallas.1} parent=11 // pred_check_branch
        %211 = sbr.rel (%p209) target = $region20
      $region19: #{basic_block_pallas.1} parent=11 // pred_region
        _
      $region20: #{basic_block_pallas.1} parent=11 // pred_fallthru
        _
      // Predicated region
      $region21: #{basic_block_pallas.1} parent=11 // pred_check
        %p212 = pneg %p102
      $region22: #{basic_block_pallas.1} parent=11 // pred_check_branch
        %214 = sbr.rel (%p212) target = $region24
      $region23: #{basic_block_pallas.1} parent=11 // pred_region
        _
      $region24: #{basic_block_pallas.1} parent=11 // pred_fallthru
        _
      // Predicated region
      $region25: #{basic_block_pallas.1} parent=11 // pred_check
        %p215 = pneg %p123
      $region26: #{basic_block_pallas.1} parent=11 // pred_check_branch
        %217 = sbr.rel (%p215) target = $region28
      $region27: #{basic_block_pallas.1} parent=11 // pred_region
        _
      $region28: #{basic_block_pallas.1} parent=11 // pred_fallthru
        _
      // Predicated region
      $region29: #{basic_block_pallas.1} parent=11 // pred_check
        %p218 = pneg %p144
      $region30: #{basic_block_pallas.1} parent=11 // pred_check_branch
        %220 = sbr.rel (%p218) target = $region32
      $region31: #{basic_block_pallas.1} parent=11 // pred_region
        _
      $region32: #{basic_block_pallas.1} parent=11 // pred_fallthru
        _
      // Predicated region
      $region33: #{basic_block_pallas.1} parent=11 // pred_check
        %p221 = pneg %p165
      $region34: #{basic_block_pallas.1} parent=11 // pred_check_branch
        %223 = sbr.rel (%p221) target = $region36
      $region35: #{basic_block_pallas.1} parent=11 // pred_region
        _
      $region36: #{basic_block_pallas.1} parent=11 // pred_fallthru
        _
    $region12: #{basic_block_pallas.1} parent=5 // pred_fallthru
      _
    %p224 = scmp.lt.s32.totalorder %s13, 2
    // Predicated region
    $region37: #{basic_block_pallas.1} parent=5 // pred_check
      %p225 = pneg %p224
    $region38: #{basic_block_pallas.1} parent=5 // pred_check_branch
      %227 = sbr.rel (%p225) target = $region40
    $region39: #{basic_block_pallas.1} parent=5 // pred_region
      // Predicated region
      $region41: #{basic_block_pallas.1} parent=39 // pred_check
        %p228 = pneg %p33
      $region42: #{basic_block_pallas.1} parent=39 // pred_check_branch
        %230 = sbr.rel (%p228) target = $region44
      $region43: #{basic_block_pallas.1} parent=39 // pred_region
        %p231 = scmp.lt.s32.totalorder %s13, 1
        %s232 = scalar_select %p231, %s13, 1
        %s233 = smul.addr %s232, 2
        %s234 = smul.addr %s233, 8
        %s235 = scalar_lea.vmem %s0, %s234
      $region44: #{basic_block_pallas.1} parent=39 // pred_fallthru
        _
    $region40: #{basic_block_pallas.1} parent=5 // pred_fallthru
      _
    %p236 = scmp.le.s32.totalorder 1, %s13
    %p237 = scmp.lt.s32.totalorder %s13, 3
    %p238 = pnand %p236, %p237
    %p239 = pneg %p238
    // Predicated region
    $region45: #{basic_block_pallas.1} parent=5 // pred_check
      _
    $region46: #{basic_block_pallas.1} parent=5 // pred_check_branch
      %241 = sbr.rel (%p238) target = $region48
    $region47: #{basic_block_pallas.1} parent=5 // pred_region
      %s242 = ssub.s32 %s13, 1
      %p243 = scmp.lt.s32.totalorder %s18, 1
      %s244 = scalar_select %p243, %s18, 1
      %s245 = smul.addr %s244, 2
      %s246 = smul.addr %s245, 8
      %s247 = scalar_lea.vmem %s0, %s246
      %p248 = pneg %p39
      %p249 = pneg %p36
      %p250 = pneg %p60
      %p251 = pneg %p57
      %p252 = pneg %p81
      %p253 = pneg %p78
      %p254 = pneg %p102
      %p255 = pneg %p99
      %p256 = pneg %p123
      %p257 = pneg %p120
      %p258 = pneg %p144
      %p259 = pneg %p141
      %p260 = pneg %p165
      %p261 = pneg %p162
      %p262 = pneg %p191
      %p263 = pneg %p188
      %p264 = scmp.lt.s32.totalorder %s18, 1
      %s265 = scalar_select %p264, %s18, 1
      %s266 = smul.addr %s265, 2
      %s267 = smul.addr %s266, 8
      %s268 = scalar_lea.vmem %s7, %s267
      %p269 = scmp.lt.s32.totalorder %s18, 1
      %s270 = scalar_select %p269, %s18, 1
      %s271 = smul.addr %s270, 2
      %s272 = smul.addr %s271, 8
      %s273 = scalar_lea.vmem %s0, %s272
      %p274 = scmp.lt.s32.totalorder %s18, 1
      %s275 = scalar_select %p274, %s18, 1
      %s276 = smul.addr %s275, 2
      %s277 = smul.addr %s276, 8
      %s278 = scalar_lea.vmem %s7, %s277
      %v279 = vld [vmem:[%s273] sm:$0xff]
      %v280 = vld [vmem:[%s273 + $0x8] sm:$0xff]
      %v281 = vld [vmem:[%s1] sm:$0x1]
      %v283 = vlaneseq
      %v284 = vshrl.u32 %v283, 7
      %v285 = vsub.s32 0, %v284
      %v286 = vrot.slane %v281, %v285
      %v288 = vmul.f32 %v279, %v286
      %v289 = vmul.f32 %v280, %v286
      %v290 = vld [vmem:[%s2] sm:$0x1]
      %v292 = vlaneseq
      %v293 = vshrl.u32 %v292, 7
      %v294 = vsub.s32 0, %v293
      %v295 = vrot.slane %v290, %v294
      %v297 = vadd.f32 %v288, %v295
      %v298 = vadd.f32 %v289, %v295
      %v299 = vmax.f32 %v297, 0.0
      %v300 = vmax.f32 %v298, 0.0
      %301 = vst [vmem:[#allocation2] sm:$0x1] 0.0
      %302 = vst [vmem:[#allocation2 + $0x11] sm:$0x1] 0.0
      %303 = vst [vmem:[#allocation2 + $0x1] sm:$0xff] %v299
      %304 = vst [vmem:[#allocation2 + $0x9] sm:$0xff] %v300
      %v305 = vld [vmem:[#allocation2] sm:$0xff]
      %v306 = vld [vmem:[#allocation2 + $0x8] sm:$0xff]
      %v307 = vld [vmem:[%s3] sm:$0xff]
      %v308 = vld [vmem:[%s3 + $0x8] sm:$0xff]
      %v309 = vld [vmem:[%s3 + $0x10] sm:$0xff]
      %v310 = vld [vmem:[%s3 + $0x18] sm:$0xff]
      %v311 = vld [vmem:[%s3 + $0x20] sm:$0xff]
      %v312 = vld [vmem:[%s3 + $0x28] sm:$0xff]
      %v313 = vld [vmem:[%s3 + $0x30] sm:$0xff]
      %v314 = vld [vmem:[%s3 + $0x38] sm:$0xff]
      %v315 = vld [vmem:[%s3 + $0x40] sm:$0xff]
      %v316 = vld [vmem:[%s3 + $0x48] sm:$0xff]
      %v317 = vld [vmem:[%s3 + $0x50] sm:$0xff]
      %v318 = vld [vmem:[%s3 + $0x58] sm:$0xff]
      %v319 = vld [vmem:[%s3 + $0x60] sm:$0xff]
      %v320 = vld [vmem:[%s3 + $0x68] sm:$0xff]
      %v321 = vld [vmem:[%s3 + $0x70] sm:$0xff]
      %v322 = vld [vmem:[%s3 + $0x78] sm:$0xff]
      %v323 = vld [vmem:[#allocation2 + $0x1] sm:$0xff]
      %v324 = vld [vmem:[#allocation2 + $0x9] sm:$0xff]
      %s325 = scalar_lea.vmem %s3, 128
      %v326 = vld [vmem:[%s325] sm:$0xff]
      %v327 = vld [vmem:[%s325 + $0x8] sm:$0xff]
      %v328 = vld [vmem:[%s325 + $0x10] sm:$0xff]
      %v329 = vld [vmem:[%s325 + $0x18] sm:$0xff]
      %v330 = vld [vmem:[%s325 + $0x20] sm:$0xff]
      %v331 = vld [vmem:[%s325 + $0x28] sm:$0xff]
      %v332 = vld [vmem:[%s325 + $0x30] sm:$0xff]
      %v333 = vld [vmem:[%s325 + $0x38] sm:$0xff]
      %v334 = vld [vmem:[%s325 + $0x40] sm:$0xff]
      %v335 = vld [vmem:[%s325 + $0x48] sm:$0xff]
      %v336 = vld [vmem:[%s325 + $0x50] sm:$0xff]
      %v337 = vld [vmem:[%s325 + $0x58] sm:$0xff]
      %v338 = vld [vmem:[%s325 + $0x60] sm:$0xff]
      %v339 = vld [vmem:[%s325 + $0x68] sm:$0xff]
      %v340 = vld [vmem:[%s325 + $0x70] sm:$0xff]
      %v341 = vld [vmem:[%s325 + $0x78] sm:$0xff]
      %342 = vmatprep.subr.mxu0 0.0
      %343 = vmatpush1.msra.mxu0 %v326
      %344 = vmatprep.subr.mxu0 0.0
      %345 = vmatpush1.msra.mxu0 %v327
      %346 = vmatprep.subr.mxu0 0.0
      %347 = vmatpush1.msra.mxu0 %v328
      %348 = vmatprep.subr.mxu0 0.0
      %349 = vmatpush1.msra.mxu0 %v329
      %350 = vmatprep.subr.mxu0 0.0
      %351 = vmatpush1.msra.mxu0 %v330
      %352 = vmatprep.subr.mxu0 0.0
      %353 = vmatpush1.msra.mxu0 %v331
      %354 = vmatprep.subr.mxu0 0.0
      %355 = vmatpush1.msra.mxu0 %v332
      %356 = vmatprep.subr.mxu0 0.0
      %357 = vmatpush1.msra.mxu0 %v333
      %358 = vmatprep.subr.mxu0 0.0
      %359 = vmatpush1.msra.mxu0 %v334
      %360 = vmatprep.subr.mxu0 0.0
      %361 = vmatpush1.msra.mxu0 %v335
      %362 = vmatprep.subr.mxu0 0.0
      %363 = vmatpush1.msra.mxu0 %v336
      %364 = vmatprep.subr.mxu0 0.0
      %365 = vmatpush1.msra.mxu0 %v337
      %366 = vmatprep.subr.mxu0 0.0
      %367 = vmatpush1.msra.mxu0 %v338
      %368 = vmatprep.subr.mxu0 0.0
      %369 = vmatpush1.msra.mxu0 %v339
      %370 = vmatprep.subr.mxu0 0.0
      %371 = vmatpush1.msra.mxu0 %v340
      %372 = vmatprep.subr.mxu0 0.0
      %373 = vmatpush1.msra.mxu0 %v341
      %374 = vmatprep.subr.mxu0 0.0
      %375 = vmatpush1.msra.mxu0 0.0
      %376 = vmatprep.subr.mxu0 0.0
      %377 = vmatpush1.msra.mxu0 0.0
      %378 = vmatprep.subr.mxu0 0.0
      %379 = vmatpush1.msra.mxu0 0.0
      %380 = vmatprep.subr.mxu0 0.0
      %381 = vmatpush1.msra.mxu0 0.0
      %382 = vmatprep.subr.mxu0 0.0
      %383 = vmatpush1.msra.mxu0 0.0
      %384 = vmatprep.subr.mxu0 0.0
      %385 = vmatpush1.msra.mxu0 0.0
      %386 = vmatprep.subr.mxu0 0.0
      %387 = vmatpush1.msra.mxu0 0.0
      %388 = vmatprep.subr.mxu0 0.0
      %389 = vmatpush1.msra.mxu0 0.0
      %390 = vmatprep.subr.mxu0 0.0
      %391 = vmatpush1.msra.mxu0 0.0
      %392 = vmatprep.subr.mxu0 0.0
      %393 = vmatpush1.msra.mxu0 0.0
      %394 = vmatprep.subr.mxu0 0.0
      %395 = vmatpush1.msra.mxu0 0.0
      %396 = vmatprep.subr.mxu0 0.0
      %397 = vmatpush1.msra.mxu0 0.0
      %398 = vmatprep.subr.mxu0 0.0
      %399 = vmatpush1.msra.mxu0 0.0
      %400 = vmatprep.subr.mxu0 0.0
      %401 = vmatpush1.msra.mxu0 0.0
      %402 = vmatprep.subr.mxu0 0.0
      %403 = vmatpush1.msra.mxu0 0.0
      %404 = vmatprep.subr.mxu0 0.0
      %405 = vmatpush1.msra.mxu0 0.0
      %406 = vmatprep.mubr.f32.mxu0 0.0
      %407 = vmatmul.mubr.f32.gmra.mrb[0].mxu0 %v323
      %v408 = vpop.f32.mrb[0].mxu0
      %v409 = vadd.f32 0.0, %v408
      %v410 = vpop.f32.mrb[0].mxu0
      %411 = vmatprep.mubr.f32.mxu0 0.0
      %412 = vmatmul.mubr.f32.gmra.mrb[0].mxu0 %v324
      %v413 = vpop.f32.mrb[0].mxu0
      %v414 = vadd.f32 0.0, %v413
      %v415 = vpop.f32.mrb[0].mxu0
      %416 = vdwg.mxu0
      %417 = vmatprep.subr.mxu0 0.0
      %418 = vmatpush1.msra.mxu0 %v307
      %419 = vmatprep.subr.mxu0 0.0
      %420 = vmatpush1.msra.mxu0 %v308
      %421 = vmatprep.subr.mxu0 0.0
      %422 = vmatpush1.msra.mxu0 %v309
      %423 = vmatprep.subr.mxu0 0.0
      %424 = vmatpush1.msra.mxu0 %v310
      %425 = vmatprep.subr.mxu0 0.0
      %426 = vmatpush1.msra.mxu0 %v311
      %427 = vmatprep.subr.mxu0 0.0
      %428 = vmatpush1.msra.mxu0 %v312
      %429 = vmatprep.subr.mxu0 0.0
      %430 = vmatpush1.msra.mxu0 %v313
      %431 = vmatprep.subr.mxu0 0.0
      %432 = vmatpush1.msra.mxu0 %v314
      %433 = vmatprep.subr.mxu0 0.0
      %434 = vmatpush1.msra.mxu0 %v315
      %435 = vmatprep.subr.mxu0 0.0
      %436 = vmatpush1.msra.mxu0 %v316
      %437 = vmatprep.subr.mxu0 0.0
      %438 = vmatpush1.msra.mxu0 %v317
      %439 = vmatprep.subr.mxu0 0.0
      %440 = vmatpush1.msra.mxu0 %v318
      %441 = vmatprep.subr.mxu0 0.0
      %442 = vmatpush1.msra.mxu0 %v319
      %443 = vmatprep.subr.mxu0 0.0
      %444 = vmatpush1.msra.mxu0 %v320
      %445 = vmatprep.subr.mxu0 0.0
      %446 = vmatpush1.msra.mxu0 %v321
      %447 = vmatprep.subr.mxu0 0.0
      %448 = vmatpush1.msra.mxu0 %v322
      %449 = vmatprep.subr.mxu0 0.0
      %450 = vmatpush1.msra.mxu0 0.0
      %451 = vmatprep.subr.mxu0 0.0
      %452 = vmatpush1.msra.mxu0 0.0
      %453 = vmatprep.subr.mxu0 0.0
      %454 = vmatpush1.msra.mxu0 0.0
      %455 = vmatprep.subr.mxu0 0.0
      %456 = vmatpush1.msra.mxu0 0.0
      %457 = vmatprep.subr.mxu0 0.0
      %458 = vmatpush1.msra.mxu0 0.0
      %459 = vmatprep.subr.mxu0 0.0
      %460 = vmatpush1.msra.mxu0 0.0
      %461 = vmatprep.subr.mxu0 0.0
      %462 = vmatpush1.msra.mxu0 0.0
      %463 = vmatprep.subr.mxu0 0.0
      %464 = vmatpush1.msra.mxu0 0.0
      %465 = vmatprep.subr.mxu0 0.0
      %466 = vmatpush1.msra.mxu0 0.0
      %467 = vmatprep.subr.mxu0 0.0
      %468 = vmatpush1.msra.mxu0 0.0
      %469 = vmatprep.subr.mxu0 0.0
      %470 = vmatpush1.msra.mxu0 0.0
      %471 = vmatprep.subr.mxu0 0.0
      %472 = vmatpush1.msra.mxu0 0.0
      %473 = vmatprep.subr.mxu0 0.0
      %474 = vmatpush1.msra.mxu0 0.0
      %475 = vmatprep.subr.mxu0 0.0
      %476 = vmatpush1.msra.mxu0 0.0
      %477 = vmatprep.subr.mxu0 0.0
      %478 = vmatpush1.msra.mxu0 0.0
      %479 = vmatprep.subr.mxu0 0.0
      %480 = vmatpush1.msra.mxu0 0.0
      %481 = vmatprep.mubr.f32.mxu0 0.0
      %482 = vmatmul.mubr.f32.gmra.mrb[0].mxu0 %v305
      %v483 = vpop.f32.mrb[0].mxu0
      %v484 = vadd.f32 %v409, %v483
      %v485 = vpop.f32.mrb[0].mxu0
      %486 = vmatprep.mubr.f32.mxu0 0.0
      %487 = vmatmul.mubr.f32.gmra.mrb[0].mxu0 %v306
      %v488 = vpop.f32.mrb[0].mxu0
      %v489 = vadd.f32 %v414, %v488
      %v490 = vpop.f32.mrb[0].mxu0
      %491 = vdwg.mxu0
      %v492 = vld [vmem:[#allocation2 + $0x2] sm:$0xff]
      %v493 = vld [vmem:[#allocation2 + $0xa] sm:$0xff]
      %s494 = scalar_lea.vmem %s3, 256
      %v495 = vld [vmem:[%s494] sm:$0xff]
      %v496 = vld [vmem:[%s494 + $0x8] sm:$0xff]
      %v497 = vld [vmem:[%s494 + $0x10] sm:$0xff]
      %v498 = vld [vmem:[%s494 + $0x18] sm:$0xff]
      %v499 = vld [vmem:[%s494 + $0x20] sm:$0xff]
      %v500 = vld [vmem:[%s494 + $0x28] sm:$0xff]
      %v501 = vld [vmem:[%s494 + $0x30] sm:$0xff]
      %v502 = vld [vmem:[%s494 + $0x38] sm:$0xff]
      %v503 = vld [vmem:[%s494 + $0x40] sm:$0xff]
      %v504 = vld [vmem:[%s494 + $0x48] sm:$0xff]
      %v505 = vld [vmem:[%s494 + $0x50] sm:$0xff]
      %v506 = vld [vmem:[%s494 + $0x58] sm:$0xff]
      %v507 = vld [vmem:[%s494 + $0x60] sm:$0xff]
      %v508 = vld [vmem:[%s494 + $0x68] sm:$0xff]
      %v509 = vld [vmem:[%s494 + $0x70] sm:$0xff]
      %v510 = vld [vmem:[%s494 + $0x78] sm:$0xff]
      %511 = vmatprep.subr.mxu0 0.0
      %512 = vmatpush1.msra.mxu0 %v495
      %513 = vmatprep.subr.mxu0 0.0
      %514 = vmatpush1.msra.mxu0 %v496
      %515 = vmatprep.subr.mxu0 0.0
      %516 = vmatpush1.msra.mxu0 %v497
      %517 = vmatprep.subr.mxu0 0.0
      %518 = vmatpush1.msra.mxu0 %v498
      %519 = vmatprep.subr.mxu0 0.0
      %520 = vmatpush1.msra.mxu0 %v499
      %521 = vmatprep.subr.mxu0 0.0
      %522 = vmatpush1.msra.mxu0 %v500
      %523 = vmatprep.subr.mxu0 0.0
      %524 = vmatpush1.msra.mxu0 %v501
      %525 = vmatprep.subr.mxu0 0.0
      %526 = vmatpush1.msra.mxu0 %v502
      %527 = vmatprep.subr.mxu0 0.0
      %528 = vmatpush1.msra.mxu0 %v503
      %529 = vmatprep.subr.mxu0 0.0
      %530 = vmatpush1.msra.mxu0 %v504
      %531 = vmatprep.subr.mxu0 0.0
      %532 = vmatpush1.msra.mxu0 %v505
      %533 = vmatprep.subr.mxu0 0.0
      %534 = vmatpush1.msra.mxu0 %v506
      %535 = vmatprep.subr.mxu0 0.0
      %536 = vmatpush1.msra.mxu0 %v507
      %537 = vmatprep.subr.mxu0 0.0
      %538 = vmatpush1.msra.mxu0 %v508
      %539 = vmatprep.subr.mxu0 0.0
      %540 = vmatpush1.msra.mxu0 %v509
      %541 = vmatprep.subr.mxu0 0.0
      %542 = vmatpush1.msra.mxu0 %v510
      %543 = vmatprep.subr.mxu0 0.0
      %544 = vmatpush1.msra.mxu0 0.0
      %545 = vmatprep.subr.mxu0 0.0
      %546 = vmatpush1.msra.mxu0 0.0
      %547 = vmatprep.subr.mxu0 0.0
      %548 = vmatpush1.msra.mxu0 0.0
      %549 = vmatprep.subr.mxu0 0.0
      %550 = vmatpush1.msra.mxu0 0.0
      %551 = vmatprep.subr.mxu0 0.0
      %552 = vmatpush1.msra.mxu0 0.0
      %553 = vmatprep.subr.mxu0 0.0
      %554 = vmatpush1.msra.mxu0 0.0
      %555 = vmatprep.subr.mxu0 0.0
      %556 = vmatpush1.msra.mxu0 0.0
      %557 = vmatprep.subr.mxu0 0.0
      %558 = vmatpush1.msra.mxu0 0.0
      %559 = vmatprep.subr.mxu0 0.0
      %560 = vmatpush1.msra.mxu0 0.0
      %561 = vmatprep.subr.mxu0 0.0
      %562 = vmatpush1.msra.mxu0 0.0
      %563 = vmatprep.subr.mxu0 0.0
      %564 = vmatpush1.msra.mxu0 0.0
      %565 = vmatprep.subr.mxu0 0.0
      %566 = vmatpush1.msra.mxu0 0.0
      %567 = vmatprep.subr.mxu0 0.0
      %568 = vmatpush1.msra.mxu0 0.0
      %569 = vmatprep.subr.mxu0 0.0
      %570 = vmatpush1.msra.mxu0 0.0
      %571 = vmatprep.subr.mxu0 0.0
      %572 = vmatpush1.msra.mxu0 0.0
      %573 = vmatprep.subr.mxu0 0.0
      %574 = vmatpush1.msra.mxu0 0.0
      %575 = vmatprep.mubr.f32.mxu0 0.0
      %576 = vmatmul.mubr.f32.gmra.mrb[0].mxu0 %v492
      %v577 = vpop.f32.mrb[0].mxu0
      %v578 = vadd.f32 0.0, %v577
      %v579 = vpop.f32.mrb[0].mxu0
      %580 = vmatprep.mubr.f32.mxu0 0.0
      %581 = vmatmul.mubr.f32.gmra.mrb[0].mxu0 %v493
      %v582 = vpop.f32.mrb[0].mxu0
      %v583 = vadd.f32 0.0, %v582
      %v584 = vpop.f32.mrb[0].mxu0
      %585 = vdwg.mxu0
      %v586 = vadd.f32 %v484, %v578
      %v587 = vadd.f32 %v489, %v583
      %v588 = vld [vmem:[%s4] sm:$0x1]
      %v590 = vlaneseq
      %v591 = vshrl.u32 %v590, 7
      %v592 = vsub.s32 0, %v591
      %v593 = vrot.slane %v588, %v592
      %v595 = vmul.f32 %v586, %v593
      %v596 = vmul.f32 %v587, %v593
      %v597 = vld [vmem:[%s5] sm:$0x1]
      %v599 = vlaneseq
      %v600 = vshrl.u32 %v599, 7
      %v601 = vsub.s32 0, %v600
      %v602 = vrot.slane %v597, %v601
      %v604 = vadd.f32 %v595, %v602
      %v605 = vadd.f32 %v596, %v602
      %v606 = vmax.f32 %v604, 0.0
      %v607 = vmax.f32 %v605, 0.0
      %608 = vst [vmem:[#allocation3] sm:$0x1] 0.0
      %609 = vst [vmem:[#allocation3 + $0x11] sm:$0x1] 0.0
      %610 = vst [vmem:[#allocation3 + $0x1] sm:$0xff] %v606
      %611 = vst [vmem:[#allocation3 + $0x9] sm:$0xff] %v607
      %v612 = vld [vmem:[#allocation3] sm:$0xff]
      %v613 = vld [vmem:[#allocation3 + $0x8] sm:$0xff]
      %v614 = vld [vmem:[%s6] sm:$0xff]
      %v615 = vld [vmem:[%s6 + $0x8] sm:$0xff]
      %v616 = vld [vmem:[%s6 + $0x10] sm:$0xff]
      %v617 = vld [vmem:[%s6 + $0x18] sm:$0xff]
      %v618 = vld [vmem:[%s6 + $0x20] sm:$0xff]
      %v619 = vld [vmem:[%s6 + $0x28] sm:$0xff]
      %v620 = vld [vmem:[%s6 + $0x30] sm:$0xff]
      %v621 = vld [vmem:[%s6 + $0x38] sm:$0xff]
      %v622 = vld [vmem:[%s6 + $0x40] sm:$0xff]
      %v623 = vld [vmem:[%s6 + $0x48] sm:$0xff]
      %v624 = vld [vmem:[%s6 + $0x50] sm:$0xff]
      %v625 = vld [vmem:[%s6 + $0x58] sm:$0xff]
      %v626 = vld [vmem:[%s6 + $0x60] sm:$0xff]
      %v627 = vld [vmem:[%s6 + $0x68] sm:$0xff]
      %v628 = vld [vmem:[%s6 + $0x70] sm:$0xff]
      %v629 = vld [vmem:[%s6 + $0x78] sm:$0xff]
      %v630 = vld [vmem:[#allocation3 + $0x1] sm:$0xff]
      %v631 = vld [vmem:[#allocation3 + $0x9] sm:$0xff]
      %s632 = scalar_lea.vmem %s6, 128
      %v633 = vld [vmem:[%s632] sm:$0xff]
      %v634 = vld [vmem:[%s632 + $0x8] sm:$0xff]
      %v635 = vld [vmem:[%s632 + $0x10] sm:$0xff]
      %v636 = vld [vmem:[%s632 + $0x18] sm:$0xff]
      %v637 = vld [vmem:[%s632 + $0x20] sm:$0xff]
      %v638 = vld [vmem:[%s632 + $0x28] sm:$0xff]
      %v639 = vld [vmem:[%s632 + $0x30] sm:$0xff]
      %v640 = vld [vmem:[%s632 + $0x38] sm:$0xff]
      %v641 = vld [vmem:[%s632 + $0x40] sm:$0xff]
      %v642 = vld [vmem:[%s632 + $0x48] sm:$0xff]
      %v643 = vld [vmem:[%s632 + $0x50] sm:$0xff]
      %v644 = vld [vmem:[%s632 + $0x58] sm:$0xff]
      %v645 = vld [vmem:[%s632 + $0x60] sm:$0xff]
      %v646 = vld [vmem:[%s632 + $0x68] sm:$0xff]
      %v647 = vld [vmem:[%s632 + $0x70] sm:$0xff]
      %v648 = vld [vmem:[%s632 + $0x78] sm:$0xff]
      %649 = vmatprep.subr.mxu0 0.0
      %650 = vmatpush1.msra.mxu0 %v633
      %651 = vmatprep.subr.mxu0 0.0
      %652 = vmatpush1.msra.mxu0 %v634
      %653 = vmatprep.subr.mxu0 0.0
      %654 = vmatpush1.msra.mxu0 %v635
      %655 = vmatprep.subr.mxu0 0.0
      %656 = vmatpush1.msra.mxu0 %v636
      %657 = vmatprep.subr.mxu0 0.0
      %658 = vmatpush1.msra.mxu0 %v637
      %659 = vmatprep.subr.mxu0 0.0
      %660 = vmatpush1.msra.mxu0 %v638
      %661 = vmatprep.subr.mxu0 0.0
      %662 = vmatpush1.msra.mxu0 %v639
      %663 = vmatprep.subr.mxu0 0.0
      %664 = vmatpush1.msra.mxu0 %v640
      %665 = vmatprep.subr.mxu0 0.0
      %666 = vmatpush1.msra.mxu0 %v641
      %667 = vmatprep.subr.mxu0 0.0
      %668 = vmatpush1.msra.mxu0 %v642
      %669 = vmatprep.subr.mxu0 0.0
      %670 = vmatpush1.msra.mxu0 %v643
      %671 = vmatprep.subr.mxu0 0.0
      %672 = vmatpush1.msra.mxu0 %v644
      %673 = vmatprep.subr.mxu0 0.0
      %674 = vmatpush1.msra.mxu0 %v645
      %675 = vmatprep.subr.mxu0 0.0
      %676 = vmatpush1.msra.mxu0 %v646
      %677 = vmatprep.subr.mxu0 0.0
      %678 = vmatpush1.msra.mxu0 %v647
      %679 = vmatprep.subr.mxu0 0.0
      %680 = vmatpush1.msra.mxu0 %v648
      %681 = vmatprep.subr.mxu0 0.0
      %682 = vmatpush1.msra.mxu0 0.0
      %683 = vmatprep.subr.mxu0 0.0
      %684 = vmatpush1.msra.mxu0 0.0
      %685 = vmatprep.subr.mxu0 0.0
      %686 = vmatpush1.msra.mxu0 0.0
      %687 = vmatprep.subr.mxu0 0.0
      %688 = vmatpush1.msra.mxu0 0.0
      %689 = vmatprep.subr.mxu0 0.0
      %690 = vmatpush1.msra.mxu0 0.0
      %691 = vmatprep.subr.mxu0 0.0
      %692 = vmatpush1.msra.mxu0 0.0
      %693 = vmatprep.subr.mxu0 0.0
      %694 = vmatpush1.msra.mxu0 0.0
      %695 = vmatprep.subr.mxu0 0.0
      %696 = vmatpush1.msra.mxu0 0.0
      %697 = vmatprep.subr.mxu0 0.0
      %698 = vmatpush1.msra.mxu0 0.0
      %699 = vmatprep.subr.mxu0 0.0
      %700 = vmatpush1.msra.mxu0 0.0
      %701 = vmatprep.subr.mxu0 0.0
      %702 = vmatpush1.msra.mxu0 0.0
      %703 = vmatprep.subr.mxu0 0.0
      %704 = vmatpush1.msra.mxu0 0.0
      %705 = vmatprep.subr.mxu0 0.0
      %706 = vmatpush1.msra.mxu0 0.0
      %707 = vmatprep.subr.mxu0 0.0
      %708 = vmatpush1.msra.mxu0 0.0
      %709 = vmatprep.subr.mxu0 0.0
      %710 = vmatpush1.msra.mxu0 0.0
      %711 = vmatprep.subr.mxu0 0.0
      %712 = vmatpush1.msra.mxu0 0.0
      %713 = vmatprep.mubr.f32.mxu0 0.0
      %714 = vmatmul.mubr.f32.gmra.mrb[0].mxu0 %v630
      %v715 = vpop.f32.mrb[0].mxu0
      %v716 = vadd.f32 0.0, %v715
      %v717 = vpop.f32.mrb[0].mxu0
      %718 = vmatprep.mubr.f32.mxu0 0.0
      %719 = vmatmul.mubr.f32.gmra.mrb[0].mxu0 %v631
      %v720 = vpop.f32.mrb[0].mxu0
      %v721 = vadd.f32 0.0, %v720
      %v722 = vpop.f32.mrb[0].mxu0
      %723 = vdwg.mxu0
      %724 = vmatprep.subr.mxu0 0.0
      %725 = vmatpush1.msra.mxu0 %v614
      %726 = vmatprep.subr.mxu0 0.0
      %727 = vmatpush1.msra.mxu0 %v615
      %728 = vmatprep.subr.mxu0 0.0
      %729 = vmatpush1.msra.mxu0 %v616
      %730 = vmatprep.subr.mxu0 0.0
      %731 = vmatpush1.msra.mxu0 %v617
      %732 = vmatprep.subr.mxu0 0.0
      %733 = vmatpush1.msra.mxu0 %v618
      %734 = vmatprep.subr.mxu0 0.0
      %735 = vmatpush1.msra.mxu0 %v619
      %736 = vmatprep.subr.mxu0 0.0
      %737 = vmatpush1.msra.mxu0 %v620
      %738 = vmatprep.subr.mxu0 0.0
      %739 = vmatpush1.msra.mxu0 %v621
      %740 = vmatprep.subr.mxu0 0.0
      %741 = vmatpush1.msra.mxu0 %v622
      %742 = vmatprep.subr.mxu0 0.0
      %743 = vmatpush1.msra.mxu0 %v623
      %744 = vmatprep.subr.mxu0 0.0
      %745 = vmatpush1.msra.mxu0 %v624
      %746 = vmatprep.subr.mxu0 0.0
      %747 = vmatpush1.msra.mxu0 %v625
      %748 = vmatprep.subr.mxu0 0.0
      %749 = vmatpush1.msra.mxu0 %v626
      %750 = vmatprep.subr.mxu0 0.0
      %751 = vmatpush1.msra.mxu0 %v627
      %752 = vmatprep.subr.mxu0 0.0
      %753 = vmatpush1.msra.mxu0 %v628
      %754 = vmatprep.subr.mxu0 0.0
      %755 = vmatpush1.msra.mxu0 %v629
      %756 = vmatprep.subr.mxu0 0.0
      %757 = vmatpush1.msra.mxu0 0.0
      %758 = vmatprep.subr.mxu0 0.0
      %759 = vmatpush1.msra.mxu0 0.0
      %760 = vmatprep.subr.mxu0 0.0
      %761 = vmatpush1.msra.mxu0 0.0
      %762 = vmatprep.subr.mxu0 0.0
      %763 = vmatpush1.msra.mxu0 0.0
      %764 = vmatprep.subr.mxu0 0.0
      %765 = vmatpush1.msra.mxu0 0.0
      %766 = vmatprep.subr.mxu0 0.0
      %767 = vmatpush1.msra.mxu0 0.0
      %768 = vmatprep.subr.mxu0 0.0
      %769 = vmatpush1.msra.mxu0 0.0
      %770 = vmatprep.subr.mxu0 0.0
      %771 = vmatpush1.msra.mxu0 0.0
      %772 = vmatprep.subr.mxu0 0.0
      %773 = vmatpush1.msra.mxu0 0.0
      %774 = vmatprep.subr.mxu0 0.0
      %775 = vmatpush1.msra.mxu0 0.0
      %776 = vmatprep.subr.mxu0 0.0
      %777 = vmatpush1.msra.mxu0 0.0
      %778 = vmatprep.subr.mxu0 0.0
      %779 = vmatpush1.msra.mxu0 0.0
      %780 = vmatprep.subr.mxu0 0.0
      %781 = vmatpush1.msra.mxu0 0.0
      %782 = vmatprep.subr.mxu0 0.0
      %783 = vmatpush1.msra.mxu0 0.0
      %784 = vmatprep.subr.mxu0 0.0
      %785 = vmatpush1.msra.mxu0 0.0
      %786 = vmatprep.subr.mxu0 0.0
      %787 = vmatpush1.msra.mxu0 0.0
      %788 = vmatprep.mubr.f32.mxu0 0.0
      %789 = vmatmul.mubr.f32.gmra.mrb[0].mxu0 %v612
      %v790 = vpop.f32.mrb[0].mxu0
      %v791 = vadd.f32 %v716, %v790
      %v792 = vpop.f32.mrb[0].mxu0
      %793 = vmatprep.mubr.f32.mxu0 0.0
      %794 = vmatmul.mubr.f32.gmra.mrb[0].mxu0 %v613
      %v795 = vpop.f32.mrb[0].mxu0
      %v796 = vadd.f32 %v721, %v795
      %v797 = vpop.f32.mrb[0].mxu0
      %798 = vdwg.mxu0
      %v799 = vld [vmem:[#allocation3 + $0x2] sm:$0xff]
      %v800 = vld [vmem:[#allocation3 + $0xa] sm:$0xff]
      %s801 = scalar_lea.vmem %s6, 256
      %v802 = vld [vmem:[%s801] sm:$0xff]
      %v803 = vld [vmem:[%s801 + $0x8] sm:$0xff]
      %v804 = vld [vmem:[%s801 + $0x10] sm:$0xff]
      %v805 = vld [vmem:[%s801 + $0x18] sm:$0xff]
      %v806 = vld [vmem:[%s801 + $0x20] sm:$0xff]
      %v807 = vld [vmem:[%s801 + $0x28] sm:$0xff]
      %v808 = vld [vmem:[%s801 + $0x30] sm:$0xff]
      %v809 = vld [vmem:[%s801 + $0x38] sm:$0xff]
      %v810 = vld [vmem:[%s801 + $0x40] sm:$0xff]
      %v811 = vld [vmem:[%s801 + $0x48] sm:$0xff]
      %v812 = vld [vmem:[%s801 + $0x50] sm:$0xff]
      %v813 = vld [vmem:[%s801 + $0x58] sm:$0xff]
      %v814 = vld [vmem:[%s801 + $0x60] sm:$0xff]
      %v815 = vld [vmem:[%s801 + $0x68] sm:$0xff]
      %v816 = vld [vmem:[%s801 + $0x70] sm:$0xff]
      %v817 = vld [vmem:[%s801 + $0x78] sm:$0xff]
      %818 = vmatprep.subr.mxu0 0.0
      %819 = vmatpush1.msra.mxu0 %v802
      %820 = vmatprep.subr.mxu0 0.0
      %821 = vmatpush1.msra.mxu0 %v803
      %822 = vmatprep.subr.mxu0 0.0
      %823 = vmatpush1.msra.mxu0 %v804
      %824 = vmatprep.subr.mxu0 0.0
      %825 = vmatpush1.msra.mxu0 %v805
      %826 = vmatprep.subr.mxu0 0.0
      %827 = vmatpush1.msra.mxu0 %v806
      %828 = vmatprep.subr.mxu0 0.0
      %829 = vmatpush1.msra.mxu0 %v807
      %830 = vmatprep.subr.mxu0 0.0
      %831 = vmatpush1.msra.mxu0 %v808
      %832 = vmatprep.subr.mxu0 0.0
      %833 = vmatpush1.msra.mxu0 %v809
      %834 = vmatprep.subr.mxu0 0.0
      %835 = vmatpush1.msra.mxu0 %v810
      %836 = vmatprep.subr.mxu0 0.0
      %837 = vmatpush1.msra.mxu0 %v811
      %838 = vmatprep.subr.mxu0 0.0
      %839 = vmatpush1.msra.mxu0 %v812
      %840 = vmatprep.subr.mxu0 0.0
      %841 = vmatpush1.msra.mxu0 %v813
      %842 = vmatprep.subr.mxu0 0.0
      %843 = vmatpush1.msra.mxu0 %v814
      %844 = vmatprep.subr.mxu0 0.0
      %845 = vmatpush1.msra.mxu0 %v815
      %846 = vmatprep.subr.mxu0 0.0
      %847 = vmatpush1.msra.mxu0 %v816
      %848 = vmatprep.subr.mxu0 0.0
      %849 = vmatpush1.msra.mxu0 %v817
      %850 = vmatprep.subr.mxu0 0.0
      %851 = vmatpush1.msra.mxu0 0.0
      %852 = vmatprep.subr.mxu0 0.0
      %853 = vmatpush1.msra.mxu0 0.0
      %854 = vmatprep.subr.mxu0 0.0
      %855 = vmatpush1.msra.mxu0 0.0
      %856 = vmatprep.subr.mxu0 0.0
      %857 = vmatpush1.msra.mxu0 0.0
      %858 = vmatprep.subr.mxu0 0.0
      %859 = vmatpush1.msra.mxu0 0.0
      %860 = vmatprep.subr.mxu0 0.0
      %861 = vmatpush1.msra.mxu0 0.0
      %862 = vmatprep.subr.mxu0 0.0
      %863 = vmatpush1.msra.mxu0 0.0
      %864 = vmatprep.subr.mxu0 0.0
      %865 = vmatpush1.msra.mxu0 0.0
      %866 = vmatprep.subr.mxu0 0.0
      %867 = vmatpush1.msra.mxu0 0.0
      %868 = vmatprep.subr.mxu0 0.0
      %869 = vmatpush1.msra.mxu0 0.0
      %870 = vmatprep.subr.mxu0 0.0
      %871 = vmatpush1.msra.mxu0 0.0
      %872 = vmatprep.subr.mxu0 0.0
      %873 = vmatpush1.msra.mxu0 0.0
      %874 = vmatprep.subr.mxu0 0.0
      %875 = vmatpush1.msra.mxu0 0.0
      %876 = vmatprep.subr.mxu0 0.0
      %877 = vmatpush1.msra.mxu0 0.0
      %878 = vmatprep.subr.mxu0 0.0
      %879 = vmatpush1.msra.mxu0 0.0
      %880 = vmatprep.subr.mxu0 0.0
      %881 = vmatpush1.msra.mxu0 0.0
      %882 = vmatprep.mubr.f32.mxu0 0.0
      %883 = vmatmul.mubr.f32.gmra.mrb[0].mxu0 %v799
      %v884 = vpop.f32.mrb[0].mxu0
      %v885 = vadd.f32 0.0, %v884
      %v886 = vpop.f32.mrb[0].mxu0
      %887 = vmatprep.mubr.f32.mxu0 0.0
      %888 = vmatmul.mubr.f32.gmra.mrb[0].mxu0 %v800
      %v889 = vpop.f32.mrb[0].mxu0
      %v890 = vadd.f32 0.0, %v889
      %v891 = vpop.f32.mrb[0].mxu0
      %892 = vdwg.mxu0
      %v893 = vadd.f32 %v791, %v885
      %v894 = vadd.f32 %v796, %v890
      %v895 = vld [vmem:[%s273] sm:$0xff]
      %v896 = vld [vmem:[%s273 + $0x8] sm:$0xff]
      %v897 = vadd.f32 %v895, %v893
      %v898 = vadd.f32 %v896, %v894
      %899 = vst [vmem:[%s278] sm:$0xff] %v897
      %900 = vst [vmem:[%s278 + $0x8] sm:$0xff] %v898
      %p901 = scmp.lt.s32.totalorder %s18, 1
      %s902 = scalar_select %p901, %s18, 1
      %s903 = smul.addr %s902, 2
      %s904 = smul.addr %s903, 8
      %s905 = scalar_lea.vmem %s7, %s904
      // Predicated region
      $region49: #{basic_block_pallas.1} parent=47 // pred_check
        %p906 = pneg %p188
      $region50: #{basic_block_pallas.1} parent=47 // pred_check_branch
        %908 = sbr.rel (%p906) target = $region52
      $region51: #{basic_block_pallas.1} parent=47 // pred_region
        _
      $region52: #{basic_block_pallas.1} parent=47 // pred_fallthru
        _
    $region48: #{basic_block_pallas.1} parent=5 // pred_fallthru
      _
    %p909 = scmp.le.s32.totalorder 2, %s13
    // Predicated region
    $region53: #{basic_block_pallas.1} parent=5 // pred_check
      %p910 = pneg %p909
    $region54: #{basic_block_pallas.1} parent=5 // pred_check_branch
      %912 = sbr.rel (%p910) target = $region56
    $region55: #{basic_block_pallas.1} parent=5 // pred_region
      %s913 = ssub.s32 %s13, 2
      // Predicated region
      $region57: #{basic_block_pallas.1} parent=55 // pred_check
        %p914 = pneg %p194
      $region58: #{basic_block_pallas.1} parent=55 // pred_check_branch
        %916 = sbr.rel (%p914) target = $region60
      $region59: #{basic_block_pallas.1} parent=55 // pred_region
        %p917 = scmp.lt.s32.totalorder %s19, 1
        %s918 = scalar_select %p917, %s19, 1
        %s919 = smul.addr %s918, 2
        %s920 = smul.addr %s919, 8
        %s921 = scalar_lea.vmem %s7, %s920
      $region60: #{basic_block_pallas.1} parent=55 // pred_fallthru
        _
    $region56: #{basic_block_pallas.1} parent=5 // pred_fallthru
      _
  $region6: #{basic_block_pallas.1} parent=0 // loop_footer
    %s17 = sadd.s32 1, %s13
  $region7: #{basic_block_pallas.1} parent=0 // loop_footer_branch
    %12 = sbr.rel target = $region3
  $region8: #{basic_block_pallas.1} parent=0 // loop_exit
    _

</llo_original>
